<compile_context>
chip_gen: v7x
topology: tpu7x:2x2x1
jax: 0.10.0
libtpu: 0.0.40
codegen_flags: <defaults>
</compile_context>

<pallas_src>
import functools

import jax
import jax.numpy as jnp
from jax.experimental import pallas as pl
from jax.experimental.pallas import tpu as pltpu


# ---------------------------------------------------------------------------
# Chip-generation tuning (static Python, evaluated at trace time).
# ---------------------------------------------------------------------------
@functools.lru_cache(maxsize=1)
def _chip_tuning():
    try:
        kind = jax.devices()[0].device_kind.lower()
    except Exception:  # unknown backend: conservative defaults
        kind = ""
    # Chips exposing two TensorCores behind one JAX device (v7x / megacore).
    multi_tc = ("7" in kind) or ("v4" in kind) or ("v5p" in kind)
    if multi_tc:
        # Bigger blocks amortize the ~0.35us per-grid-step overhead at
        # ~3.2 TB/s HBM; 2in+2out double buffers of 8 MiB = 32 MiB, which
        # fits comfortably inside v7x's 64 MiB physical VMEM.
        return {"block_bytes": 8 << 20, "vmem_limit": 48 << 20,
                "multi_tc": True, "min_steps": 4}
    # v5e / v6e: single TensorCore, 128 MiB VMEM.  4 MiB blocks are already
    # ~86% of HBM roofline; 4 buffers = 16 MiB.
    return {"block_bytes": 4 << 20, "vmem_limit": 32 << 20,
            "multi_tc": False, "min_steps": 1}


def _sublane_multiple(dtype) -> int:
    """Row granularity for sub-blocks of this dtype (sublane packing)."""
    return {4: 8, 2: 16, 1: 32}.get(jnp.dtype(dtype).itemsize, 8)


# ---------------------------------------------------------------------------
# Kernels
# ---------------------------------------------------------------------------
def _copy_kernel(x_ref, o_ref):
    # Identity on a lane-dense VMEM tile.  Concrete subclasses fuse their
    # per-tile compute here.
    o_ref[...] = x_ref[...]


def _pallas_copy_2d(x2d, tile_rows, vmem_limit):
    """Tiled, double-buffered HBM->VMEM->HBM copy of a (rows, lanes) slab."""
    rows, lanes = x2d.shape
    return pl.pallas_call(
        _copy_kernel,
        out_shape=jax.ShapeDtypeStruct((rows, lanes), x2d.dtype),
        grid=(pl.cdiv(rows, tile_rows),),
        in_specs=[pl.BlockSpec((tile_rows, lanes), lambda i: (i, 0))],
        out_specs=pl.BlockSpec((tile_rows, lanes), lambda i: (i, 0)),
        # NOTE: no input_output_aliases -- aliasing a non-donated user array
        # just makes XLA insert a defensive copy.
        compiler_params=pltpu.CompilerParams(
            dimension_semantics=("parallel",),
            vmem_limit_bytes=vmem_limit,
        ),
    )(x2d)


def _dma_copy_kernel(x_hbm, o_hbm, sem):
    # Flat HBM->HBM DMA: exactly 1x read + 1x write, no VMEM staging, no
    # (8,128) layout constraints.  Used for ragged element counts.
    copy = pltpu.make_async_copy(x_hbm, o_hbm, sem)
    copy.start()
    copy.wait()


def _pallas_dma_copy_flat(flat):
    return pl.pallas_call(
        _dma_copy_kernel,
        out_shape=jax.ShapeDtypeStruct(flat.shape, flat.dtype),
        in_specs=[pl.BlockSpec(memory_space=pl.ANY)],
        out_specs=pl.BlockSpec(memory_space=pl.ANY),
        scratch_shapes=[pltpu.SemaphoreType.DMA],
    )(flat)


# ---------------------------------------------------------------------------
# Tiling policy
# ---------------------------------------------------------------------------
def _pick_tile_rows(rows, lanes, itemsize, sublane, tune):
    bytes_per_row = lanes * itemsize
    max_rows = max(sublane,
                   (tune["block_bytes"] // bytes_per_row) // sublane * sublane)
    tile_rows = min(rows, max_rows)
    if tune["multi_tc"] and rows >= tune["min_steps"] * sublane:
        # Target >= min_steps grid steps so each TensorCore gets >= 2
        # pipelined steps (prefetch/writeback overlap on both cores).
        per_step = pl.cdiv(pl.cdiv(rows, tune["min_steps"]), sublane) * sublane
        tile_rows = min(tile_rows, per_step)
    return tile_rows


# ---------------------------------------------------------------------------
# Forward implementations (jitted; all shape logic is static at trace time).
# ---------------------------------------------------------------------------
def _forward_impl(x):
    orig_shape = x.shape
    n = int(x.size)
    if n == 0:
        return {"output": x}
    dtype = x.dtype
    itemsize = jnp.dtype(dtype).itemsize
    sublane = _sublane_multiple(dtype)
    tune = _chip_tuning()

    # Widest lane count (multiple of 128) dividing n exactly: unmasked
    # full-width stores, zero padding, reshapes are metadata-only under jit.
    lanes = None
    for cand in (2048, 1024, 512, 256, 128):
        if n % cand == 0:
            lanes = cand
            break

    if lanes is None:
        # Ragged element count: single flat HBM->HBM DMA (avoids the old
        # pad + slice round trip that turned a 2x-traffic identity into 3x+).
        out = _pallas_dma_copy_flat(x.reshape(-1)).reshape(orig_shape)
        return {"output": out}

    rows = n // lanes
    tile_rows = _pick_tile_rows(rows, lanes, itemsize, sublane, tune)
    out2d = _pallas_copy_2d(x.reshape(rows, lanes), tile_rows,
                            tune["vmem_limit"])
    return {"output": out2d.reshape(orig_shape)}


def _forward_padded_fallback(x):
    """Conservative fallback: pad the flat vector to 128 lanes, run the tiled
    copy, slice back.  Extra HBM traffic, but only uses the well-trodden
    tiled path (used if the flat HBM->HBM DMA path is unavailable)."""
    orig_shape = x.shape
    n = int(x.size)
    if n == 0:
        return {"output": x}
    dtype = x.dtype
    itemsize = jnp.dtype(dtype).itemsize
    sublane = _sublane_multiple(dtype)
    tune = _chip_tuning()

    lanes = 128
    pad = (-n) % lanes
    rows = (n + pad) // lanes
    flat = x.reshape(-1)
    if pad:
        flat = jnp.pad(flat, (0, pad))
    slab = flat.reshape(rows, lanes)
    tile_rows = _pick_tile_rows(rows, lanes, itemsize, sublane, tune)
    out2d = _pallas_copy_2d(slab, tile_rows, tune["vmem_limit"])
    out_flat = out2d.reshape(-1)
    if pad:
        out_flat = out_flat[:n]
    return {"output": out_flat.reshape(orig_shape)}


_FORWARD_MAIN = jax.jit(_forward_impl)
_FORWARD_FALLBACK = jax.jit(_forward_padded_fallback)


# ---------------------------------------------------------------------------
# Module wrapper
# ---------------------------------------------------------------------------
class BaseModelPallas:
    """JAX/Pallas analogue of BaseModel (abstract base: no parameters)."""

    def __init__(self):
        # BaseModel.__init__ registers no parameters.
        self.params = {}

    @property
    def device(self):
        # PyTorch's property returns the first parameter; there are none, so
        # expose the default JAX device instead.
        return jax.devices()[0]

    def forward(self, x: jax.Array) -> dict:
        try:
            return _FORWARD_MAIN(x)
        except Exception:
            # Conservative fallback (e.g. if the flat HBM->HBM DMA path is
            # rejected by the backend): padded tiled copy.
            return _FORWARD_FALLBACK(x)

    __call__ = forward


if __name__ == "__main__":
    key = jax.random.PRNGKey(0)
    model = BaseModelPallas()

    # Small NCHW input consistent with typical subclass usage.
    x = jax.random.normal(key, (2, 4, 16, 16), dtype=jnp.float32)
    result = model(x)
    out = jax.block_until_ready(result["output"])
    assert isinstance(result, dict)
    assert out.shape == x.shape and out.dtype == x.dtype
    assert bool(jnp.array_equal(out, x))

    # 8 MiB f32 slab: exercises the multi-grid-step tiled path.
    x2 = jax.random.normal(key, (8, 8, 128, 256), dtype=jnp.float32)
    out2 = jax.block_until_ready(model(x2)["output"])
    assert out2.shape == x2.shape and bool(jnp.array_equal(out2, x2))

    # bf16 case (16-row sublane packing).
    x3 = jax.random.normal(key, (2, 4, 16, 16), dtype=jnp.bfloat16)
    out3 = jax.block_until_ready(model(x3)["output"])
    assert out3.shape == x3.shape and out3.dtype == x3.dtype
    assert bool(jnp.all(out3 == x3))

    # Ragged element count (105 elems): flat HBM->HBM DMA path (or fallback).
    x4 = jax.random.normal(key, (3, 5, 7), dtype=jnp.float32)
    out4 = jax.block_until_ready(model(x4)["output"])
    assert out4.shape == x4.shape and bool(jnp.array_equal(out4, x4))

    print("KERNEL_OK")
</pallas_src>

<mosaic_0001>
module attributes {stable_mosaic.version = 11 : i64} {
  func.func @_copy_kernel(%arg0: i32, %arg1: memref<1x2048xf32, #tpu.memory_space<vmem>>, %arg2: memref<1x2048xf32, #tpu.memory_space<vmem>>) attributes {dimension_semantics = [#tpu.dimension_semantics<parallel>], iteration_bounds = array<i64: 1>, scalar_prefetch = 0 : i64, scratch_operands = 0 : i64, tpu.core_type = #tpu.core_type<tc>, window_params = [{transform_indices = @transform_0, window_bounds = array<i64: 1, 2048>}, {transform_indices = @transform_1, window_bounds = array<i64: 1, 2048>}]} {
    %c0 = arith.constant 0 : index
    %c0_0 = arith.constant 0 : index
    %0 = vector.load %arg1[%c0, %c0_0] : memref<1x2048xf32, #tpu.memory_space<vmem>>, vector<1x2048xf32>
    %c0_1 = arith.constant 0 : index
    %c0_2 = arith.constant 0 : index
    %1 = vector.load %arg2[%c0_1, %c0_2] : memref<1x2048xf32, #tpu.memory_space<vmem>>, vector<1x2048xf32>
    tpu.vector_store %arg2[%c0_1, %c0_2], %0 {strides = array<i32>} : memref<1x2048xf32, #tpu.memory_space<vmem>>, vector<1x2048xf32>,
    return
  }
  func.func @transform_0(%arg0: i32) -> (i32, i32) {
    %c0_i32 = arith.constant 0 : i32
    %c0_i32_0 = arith.constant 0 : i32
    return %arg0, %c0_i32 : i32, i32
  }
  func.func @transform_1(%arg0: i32) -> (i32, i32) {
    %c0_i32 = arith.constant 0 : i32
    %c0_i32_0 = arith.constant 0 : i32
    return %arg0, %c0_i32 : i32, i32
  }
}

module attributes {stable_mosaic.version = 11 : i64} {
  func.func @_copy_kernel(%arg0: i32, %arg1: memref<16x128xf32, #tpu.memory_space<vmem>>, %arg2: memref<16x128xf32, #tpu.memory_space<vmem>>) attributes {dimension_semantics = [#tpu.dimension_semantics<parallel>], iteration_bounds = array<i64: 1>, scalar_prefetch = 0 : i64, scratch_operands = 0 : i64, tpu.core_type = #tpu.core_type<tc>, window_params = [{transform_indices = @transform_0, window_bounds = array<i64: 16, 128>}, {transform_indices = @transform_1, window_bounds = array<i64: 16, 128>}]} {
    %c0 = arith.constant 0 : index
    %c0_0 = arith.constant 0 : index
    %0 = vector.load %arg1[%c0, %c0_0] : memref<16x128xf32, #tpu.memory_space<vmem>>, vector<16x128xf32>
    %c0_1 = arith.constant 0 : index
    %c0_2 = arith.constant 0 : index
    %1 = vector.load %arg2[%c0_1, %c0_2] : memref<16x128xf32, #tpu.memory_space<vmem>>, vector<16x128xf32>
    tpu.vector_store %arg2[%c0_1, %c0_2], %0 {strides = array<i32>} : memref<16x128xf32, #tpu.memory_space<vmem>>, vector<16x128xf32>,
    return
  }
  func.func @transform_0(%arg0: i32) -> (i32, i32) {
    %c0_i32 = arith.constant 0 : i32
    %c0_i32_0 = arith.constant 0 : i32
    return %arg0, %c0_i32 : i32, i32
  }
  func.func @transform_1(%arg0: i32) -> (i32, i32) {
    %c0_i32 = arith.constant 0 : i32
    %c0_i32_0 = arith.constant 0 : i32
    return %arg0, %c0_i32 : i32, i32
  }
}

</mosaic_0001>

<llo_original>
// kernel: _forward_impl.1
$region0: #{_forward_impl.1}
  #allocation0 [shape = 'u32[]', space=smem, size = 0x4, offset = 0x4, fixed_abs, tag = 'smem constant byte address 0x4 - core index']
  #allocation1 [shape = 'u32[144,128]{1,0:T(1,128)}', space=vmem, size = 0x12000, scoped, tag = 'internal scratch']
  %s0 = inlined_call_operand.vmem [shape: f32[1,2048], index: 0, kind: input, shape index: {}]
  %s1 = inlined_call_operand.vmem [shape: f32[1,2048], index: 1, kind: output, shape index: {}]
  %s2 = sld [smem:[#allocation0]]
  $region14: #{_forward_impl.1} parent=0
    _
  %s4 = ssub.s32 1, %s2
  %s5 = scalar_select 0, %s4, %s2
  // Predicated region
  $region2: #{_forward_impl.1} parent=0 // pred_check
    _
  $region3: #{_forward_impl.1} parent=0 // pred_check_branch
    %7 = sbr.rel (0) target = $region5
  $region4: #{_forward_impl.1} parent=0 // pred_region
    _
  $region5: #{_forward_impl.1} parent=0 // pred_fallthru
    _
  %v8 = vld [vmem:[%s0] sm:$0xff]
  %v9 = vld [vmem:[%s0 + $0x8] sm:$0xff]
  %10 = vst [vmem:[%s1] sm:$0xff] %v8
  %11 = vst [vmem:[%s1 + $0x8] sm:$0xff] %v9
  // Predicated region
  $region6: #{_forward_impl.1} parent=0 // pred_check
    _
  $region7: #{_forward_impl.1} parent=0 // pred_check_branch
    %13 = sbr.rel (0) target = $region9
  $region8: #{_forward_impl.1} parent=0 // pred_region
    _
  $region9: #{_forward_impl.1} parent=0 // pred_fallthru
    _
  // Predicated region
  $region10: #{_forward_impl.1} parent=0 // pred_check
    _
  $region11: #{_forward_impl.1} parent=0 // pred_check_branch
    %15 = sbr.rel (0) target = $region13
  $region12: #{_forward_impl.1} parent=0 // pred_region
    _
  $region13: #{_forward_impl.1} parent=0 // pred_fallthru
    _

// kernel: _forward_padded_fallback.1
$region0: #{_forward_padded_fallback.1}
  #allocation0 [shape = 'u32[]', space=smem, size = 0x4, offset = 0x4, fixed_abs, tag = 'smem constant byte address 0x4 - core index']
  #allocation1 [shape = 'u32[144,128]{1,0:T(1,128)}', space=vmem, size = 0x12000, scoped, tag = 'internal scratch']
  %s0 = inlined_call_operand.vmem [shape: f32[16,128], index: 0, kind: input, shape index: {}]
  %s1 = inlined_call_operand.vmem [shape: f32[16,128], index: 1, kind: output, shape index: {}]
  %s2 = sld [smem:[#allocation0]]
  $region14: #{_forward_padded_fallback.1} parent=0
    _
  %s4 = ssub.s32 1, %s2
  %s5 = scalar_select 0, %s4, %s2
  // Predicated region
  $region2: #{_forward_padded_fallback.1} parent=0 // pred_check
    _
  $region3: #{_forward_padded_fallback.1} parent=0 // pred_check_branch
    %7 = sbr.rel (0) target = $region5
  $region4: #{_forward_padded_fallback.1} parent=0 // pred_region
    _
  $region5: #{_forward_padded_fallback.1} parent=0 // pred_fallthru
    _
  %v8 = vld [vmem:[%s0] sm:$0xff]
  %v9 = vld [vmem:[%s0 + $0x8] sm:$0xff]
  %10 = vst [vmem:[%s1] sm:$0xff] %v8
  %11 = vst [vmem:[%s1 + $0x8] sm:$0xff] %v9
  // Predicated region
  $region6: #{_forward_padded_fallback.1} parent=0 // pred_check
    _
  $region7: #{_forward_padded_fallback.1} parent=0 // pred_check_branch
    %13 = sbr.rel (0) target = $region9
  $region8: #{_forward_padded_fallback.1} parent=0 // pred_region
    _
  $region9: #{_forward_padded_fallback.1} parent=0 // pred_fallthru
    _
  // Predicated region
  $region10: #{_forward_padded_fallback.1} parent=0 // pred_check
    _
  $region11: #{_forward_padded_fallback.1} parent=0 // pred_check_branch
    %15 = sbr.rel (0) target = $region13
  $region12: #{_forward_padded_fallback.1} parent=0 // pred_region
    _
  $region13: #{_forward_padded_fallback.1} parent=0 // pred_fallthru
    _

</llo_original>
